<compile_context>
chip_gen: v7x
topology: tpu7x:2x2x1
jax: 0.10.0
libtpu: 0.0.40
codegen_flags: <defaults>
</compile_context>

<pallas_src>
import functools

import jax
import jax.numpy as jnp
from jax.experimental import pallas as pl
from jax.experimental.pallas import tpu as pltpu


def _relation_attention_kernel(x_ref, wqk_ref, bqk_ref, out_ref,
                               *, num_heads, head_dim):
    # x_ref:   (S, hd)       -- one batch element (batch dim squeezed by BlockSpec)
    # wqk_ref: (hd, 2*H*D)   -- pre-transposed, [scaled Wq | Wk] packed, head-major cols
    # bqk_ref: (1, 2*H*D)    -- [scaled bq | bk], single lane-dense row
    # out_ref: (H, S, S)
    H, D = num_heads, head_dim
    HD = H * D

    # One flat MXU matmul produces q (pre-scaled) and k for every head at once.
    qk = jnp.dot(x_ref[...], wqk_ref[...],
                 preferred_element_type=jnp.float32) + bqk_ref[...]      # (S, 2*HD)

    # Re-slice the 64-lane result into head-major (H, S, D) operands
    # (static lane slices + concat along the leading axis; no reshape of the
    # lane dim, no in-kernel transpose of x or the weights).
    q = jnp.stack([qk[:, h * D:(h + 1) * D] for h in range(H)], axis=0)       # (H,S,D)
    k = jnp.stack([qk[:, HD + h * D:HD + (h + 1) * D] for h in range(H)], axis=0)

    # Head-batched scores on the MXU; contraction over D (no explicit k.T).
    s = jnp.einsum('hqd,hkd->hqk', q, k,
                   preferred_element_type=jnp.float32)                   # (H, S, S)

    # Softmax over the key axis (PyTorch dim=3), exact arithmetic.
    m = jnp.max(s, axis=-1, keepdims=True)
    e = jnp.exp(s - m)
    attn = e / jnp.sum(e, axis=-1, keepdims=True)

    out_ref[...] = attn.astype(out_ref.dtype)      # single store per grid step


def relation_attention(x, wq, bq, wk, bk, *, num_heads, head_dim):
    """x: (B, S, hd); wq/wk: (H*D, hd)  [PyTorch (out,in) layout]; bq/bk: (H*D,).

    Returns attention weights of shape (B, num_heads, S, S).
    """
    B, S, hd = x.shape
    H, D = num_heads, head_dim
    HD = H * D
    assert wq.shape == (HD, hd) and wk.shape == (HD, hd)
    assert bq.shape == (HD,) and bk.shape == (HD,)
    scaling = float(head_dim) ** (-0.5)

    # Host-side constant folding (free): pre-transpose the Linear weights to
    # (in, out), fold the q scaling into Wq/bq, and pack Q|K so the kernel does
    # a single flat (S, hd) @ (hd, 2*HD) projection with one bias row.
    wqk = jnp.concatenate([wq.T * scaling, wk.T], axis=1)            # (hd, 2*HD)
    bqk = jnp.concatenate([bq * scaling, bk]).reshape(1, 2 * HD)     # (1, 2*HD)

    kernel = functools.partial(_relation_attention_kernel,
                               num_heads=H, head_dim=D)

    # Advisory cost hint for the XLA scheduler (kernel is launch-bound at this size).
    flops = 2 * B * S * hd * (2 * HD) + 2 * B * H * S * S * D
    transcendentals = B * H * S * S                                   # exp in softmax
    bytes_accessed = 4 * (x.size + wqk.size + bqk.size + B * H * S * S)

    # TODO(synk): for production S on v6e/v7x, cast MXU operands to bf16 (f32
    # accumulate) and tile the (H, S, S) scores over query rows flash-style.
    return pl.pallas_call(
        kernel,
        out_shape=jax.ShapeDtypeStruct((B, H, S, S), jnp.float32),
        grid=(B,),                                                    # batch axis; parallel on v7x's 2 TCs
        in_specs=[
            pl.BlockSpec((None, S, hd), lambda b: (b, 0, 0)),         # x[b]      (S, hd)
            pl.BlockSpec((hd, 2 * HD), lambda b: (0, 0)),             # packed Wq|Wk (resident)
            pl.BlockSpec((1, 2 * HD), lambda b: (0, 0)),              # packed bq|bk (resident)
        ],
        out_specs=pl.BlockSpec((None, H, S, S), lambda b: (b, 0, 0, 0)),
        compiler_params=pltpu.CompilerParams(
            dimension_semantics=("parallel",)),
        cost_estimate=pl.CostEstimate(flops=flops,
                                      transcendentals=transcendentals,
                                      bytes_accessed=bytes_accessed),
    )(x, wqk, bqk)


def _reference(x, wq, bq, wk, bk, *, num_heads, head_dim):
    # Pure-JAX reference mirroring the PyTorch forward exactly.
    B, S, hd = x.shape
    scaling = float(head_dim) ** (-0.5)
    q = jnp.einsum('bsc,oc->bso', x, wq) + bq                # (B, S, H*D)
    k = jnp.einsum('bsc,oc->bso', x, wk) + bk
    q = q.reshape(B, S, num_heads, head_dim) * scaling
    k = k.reshape(B, S, num_heads, head_dim)
    scores = jnp.einsum('bihd,bjhd->bhij', q, k)             # (B, H, S, S)
    return jax.nn.softmax(scores, axis=-1)


if __name__ == "__main__":
    # Module hyperparameters: relationHiddenDim=32, relationHeadDim=8,
    # relationNum=4 heads. Input (batch=2, seq=8, hidden=32).
    B, S, hd = 2, 8, 32
    num_heads, head_dim = 4, 8
    HD = num_heads * head_dim

    key = jax.random.PRNGKey(0)
    kx, kq, kk = jax.random.split(key, 3)

    x = jax.random.normal(kx, (B, S, hd), dtype=jnp.float32)

    # Deterministic xavier_uniform init (fan_in=hd, fan_out=HD), zero biases.
    # PyTorch nn.Linear weight layout is (out, in) = (HD, hd).
    bound = (6.0 / (hd + HD)) ** 0.5
    wq = jax.random.uniform(kq, (HD, hd), minval=-bound, maxval=bound,
                            dtype=jnp.float32)
    wk = jax.random.uniform(kk, (HD, hd), minval=-bound, maxval=bound,
                            dtype=jnp.float32)
    bq = jnp.zeros((HD,), dtype=jnp.float32)
    bk = jnp.zeros((HD,), dtype=jnp.float32)

    out = relation_attention(x, wq, bq, wk, bk,
                             num_heads=num_heads, head_dim=head_dim)
    out = jax.block_until_ready(out)

    ref = _reference(x, wq, bq, wk, bk, num_heads=num_heads, head_dim=head_dim)
    assert out.shape == (B, num_heads, S, S)
    # Exact softmax divide restored -> tight tolerance again.
    assert jnp.allclose(out, ref, atol=1e-5, rtol=1e-5)
    # Attention rows are proper probabilities.
    assert jnp.allclose(out.sum(-1), jnp.ones((B, num_heads, S)), atol=1e-5)

    print("KERNEL_OK")
</pallas_src>

<mosaic_0001>
module attributes {stable_mosaic.version = 11 : i64} {
  func.func @_relation_attention_kernel(%arg0: i32, %arg1: memref<1x8x32xf32, #tpu.memory_space<vmem>>, %arg2: memref<32x64xf32, #tpu.memory_space<vmem>>, %arg3: memref<1x64xf32, #tpu.memory_space<vmem>>, %arg4: memref<1x4x8x8xf32, #tpu.memory_space<vmem>>) attributes {dimension_semantics = [#tpu.dimension_semantics<parallel>], iteration_bounds = array<i64: 2>, scalar_prefetch = 0 : i64, scratch_operands = 0 : i64, tpu.core_type = #tpu.core_type<tc>, window_params = [{transform_indices = @transform_0, window_bounds = array<i64: 1, 8, 32>}, {pipeline_mode = #tpu.pipeline_mode<synchronous>, transform_indices = @transform_1, window_bounds = array<i64: 32, 64>}, {pipeline_mode = #tpu.pipeline_mode<synchronous>, transform_indices = @transform_2, window_bounds = array<i64: 1, 64>}, {transform_indices = @transform_3, window_bounds = array<i64: 1, 4, 8, 8>}]} {
    %c0 = arith.constant 0 : index
    %c0_0 = arith.constant 0 : index
    %c0_1 = arith.constant 0 : index
    %0 = vector.load %arg1[%c0, %c0_0, %c0_1] : memref<1x8x32xf32, #tpu.memory_space<vmem>>, vector<1x8x32xf32>
    %1 = vector.shape_cast %0 : vector<1x8x32xf32> to vector<8x32xf32>
    %c0_2 = arith.constant 0 : index
    %c0_3 = arith.constant 0 : index
    %2 = vector.load %arg2[%c0_2, %c0_3] : memref<32x64xf32, #tpu.memory_space<vmem>>, vector<32x64xf32>
    %cst = arith.constant dense<0.000000e+00> : vector<8x64xf32>
    %3 = tpu.matmul %1, %2, %cst {dimension_numbers = #tpu.dot_dimension_numbers<[1], [0], [0], [1], [0, 0, 1, 1], [], []>} : vector<8x32xf32>, vector<32x64xf32>, vector<8x64xf32> -> vector<8x64xf32>
    %c0_4 = arith.constant 0 : index
    %c0_5 = arith.constant 0 : index
    %4 = vector.load %arg3[%c0_4, %c0_5] : memref<1x64xf32, #tpu.memory_space<vmem>>, vector<1x64xf32>
    %5 = vector.broadcast %4 : vector<1x64xf32> to vector<8x64xf32>
    %6 = arith.addf %3, %5 : vector<8x64xf32>
    %7 = vector.extract_strided_slice %6 {offsets = [0, 0], sizes = [8, 8], strides = [1, 1]} : vector<8x64xf32> to vector<8x8xf32>
    %8 = vector.extract_strided_slice %6 {offsets = [0, 8], sizes = [8, 8], strides = [1, 1]} : vector<8x64xf32> to vector<8x8xf32>
    %9 = vector.extract_strided_slice %6 {offsets = [0, 16], sizes = [8, 8], strides = [1, 1]} : vector<8x64xf32> to vector<8x8xf32>
    %10 = vector.extract_strided_slice %6 {offsets = [0, 24], sizes = [8, 8], strides = [1, 1]} : vector<8x64xf32> to vector<8x8xf32>
    %11 = vector.shape_cast %7 : vector<8x8xf32> to vector<1x8x8xf32>
    %12 = vector.shape_cast %8 : vector<8x8xf32> to vector<1x8x8xf32>
    %13 = vector.shape_cast %9 : vector<8x8xf32> to vector<1x8x8xf32>
    %14 = vector.shape_cast %10 : vector<8x8xf32> to vector<1x8x8xf32>
    %15 = tpu.concatenate %11, %12, %13, %14 in 0 : vector<1x8x8xf32>, vector<1x8x8xf32>, vector<1x8x8xf32>, vector<1x8x8xf32> -> vector<4x8x8xf32>
    %16 = vector.extract_strided_slice %6 {offsets = [0, 32], sizes = [8, 8], strides = [1, 1]} : vector<8x64xf32> to vector<8x8xf32>
    %17 = vector.extract_strided_slice %6 {offsets = [0, 40], sizes = [8, 8], strides = [1, 1]} : vector<8x64xf32> to vector<8x8xf32>
    %18 = vector.extract_strided_slice %6 {offsets = [0, 48], sizes = [8, 8], strides = [1, 1]} : vector<8x64xf32> to vector<8x8xf32>
    %19 = vector.extract_strided_slice %6 {offsets = [0, 56], sizes = [8, 8], strides = [1, 1]} : vector<8x64xf32> to vector<8x8xf32>
    %20 = vector.shape_cast %16 : vector<8x8xf32> to vector<1x8x8xf32>
    %21 = vector.shape_cast %17 : vector<8x8xf32> to vector<1x8x8xf32>
    %22 = vector.shape_cast %18 : vector<8x8xf32> to vector<1x8x8xf32>
    %23 = vector.shape_cast %19 : vector<8x8xf32> to vector<1x8x8xf32>
    %24 = tpu.concatenate %20, %21, %22, %23 in 0 : vector<1x8x8xf32>, vector<1x8x8xf32>, vector<1x8x8xf32>, vector<1x8x8xf32> -> vector<4x8x8xf32>
    "tpu.trace_start"() <{level = 10 : i32, message = "hqd,hkd->hqk"}> : () -> ()
    %cst_6 = arith.constant dense<0.000000e+00> : vector<4x8x8xf32>
    %25 = tpu.matmul %15, %24, %cst_6 {dimension_numbers = #tpu.dot_dimension_numbers<[2], [2], [1], [1], [0, 0, 0, 1, 1, 1], [0], [0]>} : vector<4x8x8xf32>, vector<4x8x8xf32>, vector<4x8x8xf32> -> vector<4x8x8xf32>
    "tpu.trace_stop"() : () -> ()
    %cst_7 = arith.constant dense<0xFF800000> : vector<4x8xf32>
    %26 = vector.multi_reduction <maximumf>, %25, %cst_7 [2] : vector<4x8x8xf32> to vector<4x8xf32>
    %27 = vector.shape_cast %26 : vector<4x8xf32> to vector<4x8x1xf32>
    %28 = vector.broadcast %27 : vector<4x8x1xf32> to vector<4x8x8xf32>
    %29 = arith.subf %25, %28 : vector<4x8x8xf32>
    %30 = math.exp %29 : vector<4x8x8xf32>
    %cst_8 = arith.constant dense<0.000000e+00> : vector<4x8xf32>
    %31 = vector.multi_reduction <add>, %30, %cst_8 [2] : vector<4x8x8xf32> to vector<4x8xf32>
    %32 = vector.shape_cast %31 : vector<4x8xf32> to vector<4x8x1xf32>
    %33 = vector.broadcast %32 : vector<4x8x1xf32> to vector<4x8x8xf32>
    %34 = arith.divf %30, %33 : vector<4x8x8xf32>
    %c0_9 = arith.constant 0 : index
    %c0_10 = arith.constant 0 : index
    %c0_11 = arith.constant 0 : index
    %c0_12 = arith.constant 0 : index
    %35 = vector.load %arg4[%c0_9, %c0_10, %c0_11, %c0_12] : memref<1x4x8x8xf32, #tpu.memory_space<vmem>>, vector<1x4x8x8xf32>
    %36 = vector.shape_cast %35 : vector<1x4x8x8xf32> to vector<4x8x8xf32>
    %37 = vector.shape_cast %34 : vector<4x8x8xf32> to vector<1x4x8x8xf32>
    tpu.vector_store %arg4[%c0_9, %c0_10, %c0_11, %c0_12], %37 {strides = array<i32>} : memref<1x4x8x8xf32, #tpu.memory_space<vmem>>, vector<1x4x8x8xf32>,
    return
  }
  func.func @transform_0(%arg0: i32) -> (i32, i32, i32) {
    %c0_i32 = arith.constant 0 : i32
    %c0_i32_0 = arith.constant 0 : i32
    %c0_i32_1 = arith.constant 0 : i32
    return %arg0, %c0_i32, %c0_i32_0 : i32, i32, i32
  }
  func.func @transform_1(%arg0: i32) -> (i32, i32) {
    %c0_i32 = arith.constant 0 : i32
    %c0_i32_0 = arith.constant 0 : i32
    %c0_i32_1 = arith.constant 0 : i32
    return %c0_i32, %c0_i32_0 : i32, i32
  }
  func.func @transform_2(%arg0: i32) -> (i32, i32) {
    %c0_i32 = arith.constant 0 : i32
    %c0_i32_0 = arith.constant 0 : i32
    %c0_i32_1 = arith.constant 0 : i32
    return %c0_i32, %c0_i32_0 : i32, i32
  }
  func.func @transform_3(%arg0: i32) -> (i32, i32, i32, i32) {
    %c0_i32 = arith.constant 0 : i32
    %c0_i32_0 = arith.constant 0 : i32
    %c0_i32_1 = arith.constant 0 : i32
    %c0_i32_2 = arith.constant 0 : i32
    return %arg0, %c0_i32, %c0_i32_0, %c0_i32_1 : i32, i32, i32, i32
  }
}

</mosaic_0001>

<llo_original>
// kernel: tpu_custom_call.1
$region0: #{tpu_custom_call.1}
  #allocation0 [shape = 'u32[]', space=smem, size = 0x4, offset = 0x4, fixed_abs, tag = 'smem constant byte address 0x4 - core index']
  #allocation1 [shape = 'u32[144,128]{1,0:T(1,128)}', space=vmem, size = 0x12000, scoped, tag = 'internal scratch']
  %s0 = inlined_call_operand.hbm [shape: f32[2,8,32], index: 0, kind: input, shape index: {}]
  %s1 = inlined_call_operand.hbm [shape: f32[32,64], index: 1, kind: input, shape index: {}]
  %s2 = inlined_call_operand.vmem [shape: f32[1,64], index: 2, kind: input, shape index: {}]
  %s3 = inlined_call_operand.hbm [shape: f32[2,4,8,8], index: 3, kind: output, shape index: {}]
  %s4 = sld [smem:[#allocation0]]
  $region53: #{tpu_custom_call.1} parent=0
    _
  %s6 = ssub.s32 1, %s4
  %s7 = scalar_select 0, %s6, %s4
  $region1: #{tpu_custom_call.1} parent=0
    #allocation2 [shape = 'u8[8192]{0}', space=vmem, size = 0x2000, scoped, tag = 'input window, operand 0']
    #allocation3 [shape = 's32[2]{0}', space=sflag, size = 0x8, scoped, tag = 'scoped memory for tpu_custom_call.1']
    #allocation4 [shape = 's32[2]{0}', space=sflag, size = 0x8, scoped, tag = 'scoped memory for tpu_custom_call.1']
    #allocation5 [shape = 'u8[16384]{0}', space=vmem, size = 0x4000, scoped, tag = 'input window, operand 1, single buffered']
    #allocation6 [shape = 's32[1]{0}', space=sflag, size = 0x4, scoped, tag = 'scoped memory for tpu_custom_call.1']
    #allocation7 [shape = 'u8[32768]{0}', space=vmem, size = 0x8000, scoped, tag = 'output window, operand 0']
    %8 = vsyncpa [#allocation3], 0
    %s9 = scalar_lea.sflag [#allocation3], 1
    %10 = vsyncpa %s9, 0
    %11 = vsyncpa [#allocation6], 0
    %12 = vsyncpa [#allocation4], 0
    %s13 = scalar_lea.sflag [#allocation4], 1
    %14 = vsyncpa %s13, 0
    loop: start=0, step=1, limit=4
    $region2: #{tpu_custom_call.1} parent=1 // loop_pre_header
      _
    $region3: #{tpu_custom_call.1} parent=1 // loop_header
      %s16 = sphi 0, %s20
      %p17 = scmp.ge.s32.totalorder %s16, 4
      %s26 = sphi 0, %s28
      %s29 = sphi 0, %s26
      %s30 = sphi 0, %s29
      %s46 = sphi 0, %s30
      %s50 = sphi 0, %s50
      %s52 = sphi 0, %s50
      %s53 = sphi 0, %s52
      %s67 = sphi 0, %s53
      %s71 = sphi 0, %s71
      %s73 = sphi 0, %s71
      %s74 = sphi 0, %s73
      %s88 = sphi 0, %s74
      %s94 = sphi 0, %s96
      %s97 = sphi 0, %s94
      %s98 = sphi 0, %s97
      %s114 = sphi 0, %s98
    $region4: #{tpu_custom_call.1} parent=1 // loop_header_branch
      %19 = sbr.rel (%p17) target = $region8
    $region5: #{tpu_custom_call.1} parent=1 // loop_body
      %s21 = ssub.s32 %s16, 1
      %s22 = ssub.s32 %s16, 2
      %s23 = sadd.s32 %s16, 1
      %s24 = ssub.s32 %s16, %s23
      %p25 = scmp.eq.s32.totalorder %s24, 0
      %s27 = sadd.s32 %s26, 1
      %s28 = scalar_select %p25, %s26, %s27
      %p31 = pneg %p25
      %p32 = scmp.eq.s32.totalorder %s16, 1
      %p33 = por %p31, %p32
      %p34 = scmp.ne.s32.totalorder %s26, %s29
      %p35 = scmp.eq.s32.totalorder %s16, 0
      %p36 = por %p34, %p35
      %p37 = scmp.ne.s32.totalorder %s26, %s29
      %p38 = scmp.eq.s32.totalorder %s21, 1
      %p39 = por %p37, %p38
      %p40 = scmp.ne.s32.totalorder %s29, %s30
      %p41 = scmp.eq.s32.totalorder %s21, 0
      %p42 = por %p40, %p41
      %p43 = scmp.ne.s32.totalorder %s29, %s30
      %p44 = scmp.eq.s32.totalorder %s22, 1
      %p45 = por %p43, %p44
      %p47 = scmp.ne.s32.totalorder %s30, %s46
      %p48 = scmp.eq.s32.totalorder %s22, 0
      %p49 = por %p47, %p48
      %s51 = sadd.s32 %s50, 1
      %p54 = scmp.eq.s32.totalorder %s16, 1
      %p55 = scmp.ne.s32.totalorder %s50, %s52
      %p56 = scmp.eq.s32.totalorder %s16, 0
      %p57 = por %p55, %p56
      %p58 = scmp.ne.s32.totalorder %s50, %s52
      %p59 = scmp.eq.s32.totalorder %s21, 1
      %p60 = por %p58, %p59
      %p61 = scmp.ne.s32.totalorder %s52, %s53
      %p62 = scmp.eq.s32.totalorder %s21, 0
      %p63 = por %p61, %p62
      %p64 = scmp.ne.s32.totalorder %s52, %s53
      %p65 = scmp.eq.s32.totalorder %s22, 1
      %p66 = por %p64, %p65
      %p68 = scmp.ne.s32.totalorder %s53, %s67
      %p69 = scmp.eq.s32.totalorder %s22, 0
      %p70 = por %p68, %p69
      %s72 = sadd.s32 %s71, 1
      %p75 = scmp.eq.s32.totalorder %s16, 1
      %p76 = scmp.ne.s32.totalorder %s71, %s73
      %p77 = scmp.eq.s32.totalorder %s16, 0
      %p78 = por %p76, %p77
      %p79 = scmp.ne.s32.totalorder %s71, %s73
      %p80 = scmp.eq.s32.totalorder %s21, 1
      %p81 = por %p79, %p80
      %p82 = scmp.ne.s32.totalorder %s73, %s74
      %p83 = scmp.eq.s32.totalorder %s21, 0
      %p84 = por %p82, %p83
      %p85 = scmp.ne.s32.totalorder %s73, %s74
      %p86 = scmp.eq.s32.totalorder %s22, 1
      %p87 = por %p85, %p86
      %p89 = scmp.ne.s32.totalorder %s74, %s88
      %p90 = scmp.eq.s32.totalorder %s22, 0
      %p91 = por %p89, %p90
      %s92 = ssub.s32 %s16, %s23
      %p93 = scmp.eq.s32.totalorder %s92, 0
      %s95 = sadd.s32 %s94, 1
      %s96 = scalar_select %p93, %s94, %s95
      %p99 = pneg %p93
      %p100 = scmp.eq.s32.totalorder %s16, 1
      %p101 = por %p99, %p100
      %p102 = scmp.ne.s32.totalorder %s94, %s97
      %p103 = scmp.eq.s32.totalorder %s16, 0
      %p104 = por %p102, %p103
      %p105 = scmp.ne.s32.totalorder %s94, %s97
      %p106 = scmp.eq.s32.totalorder %s21, 1
      %p107 = por %p105, %p106
      %p108 = scmp.ne.s32.totalorder %s97, %s98
      %p109 = scmp.eq.s32.totalorder %s21, 0
      %p110 = por %p108, %p109
      %p111 = scmp.ne.s32.totalorder %s97, %s98
      %p112 = scmp.eq.s32.totalorder %s22, 1
      %p113 = por %p111, %p112
      %p115 = scmp.ne.s32.totalorder %s98, %s114
      %p116 = scmp.eq.s32.totalorder %s22, 0
      %p117 = por %p115, %p116
      %p118 = scmp.le.s32.totalorder 1, %s16
      %p119 = scmp.lt.s32.totalorder %s16, 3
      %p120 = pnand %p118, %p119
      %p121 = pneg %p120
      // Predicated region
      $region9: #{tpu_custom_call.1} parent=5 // pred_check
        _
      $region10: #{tpu_custom_call.1} parent=5 // pred_check_branch
        %123 = sbr.rel (%p120) target = $region12
      $region11: #{tpu_custom_call.1} parent=5 // pred_region
        %s124 = ssub.s32 %s16, 1
        // Predicated region
        $region13: #{tpu_custom_call.1} parent=11 // pred_check
          %p125 = pneg %p63
        $region14: #{tpu_custom_call.1} parent=11 // pred_check_branch
          %127 = sbr.rel (%p125) target = $region16
        $region15: #{tpu_custom_call.1} parent=11 // pred_region
          %s129 = ssub.s32 512, 512
          %130 = vsyncadd [#allocation6], %s129
          %s131 = sshll.u32 [#allocation5], 4
          %s132 = int_to_ptr.vmem [resolvable:$true] %s131
          %137 = dma.hbm_to_vmem [thread:$0]  %s1, 512, %s132, [#allocation6], 128, 128, 8
        $region16: #{tpu_custom_call.1} parent=11 // pred_fallthru
          _
        // Predicated region
        $region17: #{tpu_custom_call.1} parent=11 // pred_check
          %p138 = pneg %p84
        $region18: #{tpu_custom_call.1} parent=11 // pred_check_branch
          %140 = sbr.rel (%p138) target = $region20
        $region19: #{tpu_custom_call.1} parent=11 // pred_region
          _
        $region20: #{tpu_custom_call.1} parent=11 // pred_fallthru
          _
      $region12: #{tpu_custom_call.1} parent=5 // pred_fallthru
        _
      %p141 = scmp.lt.s32.totalorder %s16, 2
      // Predicated region
      $region21: #{tpu_custom_call.1} parent=5 // pred_check
        %p142 = pneg %p141
      $region22: #{tpu_custom_call.1} parent=5 // pred_check_branch
        %144 = sbr.rel (%p142) target = $region24
      $region23: #{tpu_custom_call.1} parent=5 // pred_region
        // Predicated region
        $region25: #{tpu_custom_call.1} parent=23 // pred_check
          %p145 = pneg %p36
        $region26: #{tpu_custom_call.1} parent=23 // pred_check_branch
          %147 = sbr.rel (%p145) target = $region28
        $region27: #{tpu_custom_call.1} parent=23 // pred_region
          %s148 = sand.u32 %s26, 1
          %s149 = scalar_lea.sflag [#allocation3], %s148
          %s150 = sand.u32 %s26, 1
          %s151 = smul.addr %s150, 8
          %s152 = scalar_lea.vmem [#allocation2], %s151
          %s154 = ssub.s32 128, 128
          %155 = vsyncadd %s149, %s154
          %s156 = smul.addr %s16, 128
          %s157 = scalar_lea.hbm %s0, %s156
          %s159 = sshll.u32 %s152, 4
          %s160 = int_to_ptr.vmem [resolvable:$true] %s159
          %162 = dma.hbm_to_vmem [thread:$0]  %s157, 128, %s160, %s149
        $region28: #{tpu_custom_call.1} parent=23 // pred_fallthru
          _
      $region24: #{tpu_custom_call.1} parent=5 // pred_fallthru
        _
      %p163 = scmp.le.s32.totalorder 1, %s16
      %p164 = scmp.lt.s32.totalorder %s16, 3
      %p165 = pnand %p163, %p164
      %p166 = pneg %p165
      // Predicated region
      $region29: #{tpu_custom_call.1} parent=5 // pred_check
        _
      $region30: #{tpu_custom_call.1} parent=5 // pred_check_branch
        %168 = sbr.rel (%p165) target = $region32
      $region31: #{tpu_custom_call.1} parent=5 // pred_region
        %s169 = ssub.s32 %s16, 1
        %s170 = sand.u32 %s29, 1
        %s171 = scalar_lea.sflag [#allocation3], %s170
        %s172 = sand.u32 %s29, 1
        %s173 = smul.addr %s172, 8
        %s174 = scalar_lea.vmem [#allocation2], %s173
        // Predicated region
        $region33: #{tpu_custom_call.1} parent=31 // pred_check
          %p175 = pneg %p42
        $region34: #{tpu_custom_call.1} parent=31 // pred_check_branch
          %177 = sbr.rel (%p175) target = $region36
        $region35: #{tpu_custom_call.1} parent=31 // pred_region
          %178 = dma.done %s171, 128
        $region36: #{tpu_custom_call.1} parent=31 // pred_fallthru
          _
        // Predicated region
        $region37: #{tpu_custom_call.1} parent=31 // pred_check
          %p179 = pneg %p63
        $region38: #{tpu_custom_call.1} parent=31 // pred_check_branch
          %181 = sbr.rel (%p179) target = $region40
        $region39: #{tpu_custom_call.1} parent=31 // pred_region
          %182 = dma.done [#allocation6], 512
        $region40: #{tpu_custom_call.1} parent=31 // pred_fallthru
          _
        %s183 = sand.u32 %s29, 1
        %s184 = scalar_lea.sflag [#allocation3], %s183
        %s185 = sand.u32 %s29, 1
        %s186 = smul.addr %s185, 8
        %s187 = scalar_lea.vmem [#allocation2], %s186
        %p188 = pneg %p42
        %p189 = pneg %p39
        %p190 = pneg %p63
        %p191 = pneg %p60
        %p192 = pneg %p84
        %p193 = pneg %p81
        %p194 = pneg %p110
        %p195 = pneg %p107
        %s196 = sand.u32 %s97, 1
        %s197 = scalar_lea.sflag [#allocation4], %s196
        %s198 = sand.u32 %s97, 1
        %s199 = smul.addr %s198, 32
        %s200 = scalar_lea.vmem [#allocation7], %s199
        %v201 = vld [vmem:[%s174] sm:$0xff]
        %v202 = vld [vmem:[#allocation5] sm:$0xff]
        %v203 = vld [vmem:[#allocation5 + $0x8] sm:$0xff]
        %v204 = vld [vmem:[#allocation5 + $0x10] sm:$0xff]
        %v205 = vld [vmem:[#allocation5 + $0x18] sm:$0xff]
        %v206 = vld [vmem:[%s2] sm:$0x1]
        %v208 = vlaneseq
        %v209 = vshrl.u32 %v208, 7
        %v210 = vsub.s32 0, %v209
        %v211 = vrot.slane %v206, %v210
        %vm213 = vcmask 261120
        %v215 = vsel %vm213, %v201, 0
        %217 = vmatprep.subr.mxu0 0.0
        %218 = vmatpush1.msra.mxu0 %v202
        %219 = vmatprep.subr.mxu0 0.0
        %220 = vmatpush1.msra.mxu0 %v203
        %221 = vmatprep.subr.mxu0 0.0
        %222 = vmatpush1.msra.mxu0 %v204
        %223 = vmatprep.subr.mxu0 0.0
        %224 = vmatpush1.msra.mxu0 %v205
        %225 = vmatprep.subr.mxu0 0.0
        %226 = vmatpush1.msra.mxu0 0.0
        %227 = vmatprep.subr.mxu0 0.0
        %228 = vmatpush1.msra.mxu0 0.0
        %229 = vmatprep.subr.mxu0 0.0
        %230 = vmatpush1.msra.mxu0 0.0
        %231 = vmatprep.subr.mxu0 0.0
        %232 = vmatpush1.msra.mxu0 0.0
        %233 = vmatprep.subr.mxu0 0.0
        %234 = vmatpush1.msra.mxu0 0.0
        %235 = vmatprep.subr.mxu0 0.0
        %236 = vmatpush1.msra.mxu0 0.0
        %237 = vmatprep.subr.mxu0 0.0
        %238 = vmatpush1.msra.mxu0 0.0
        %239 = vmatprep.subr.mxu0 0.0
        %240 = vmatpush1.msra.mxu0 0.0
        %241 = vmatprep.subr.mxu0 0.0
        %242 = vmatpush1.msra.mxu0 0.0
        %243 = vmatprep.subr.mxu0 0.0
        %244 = vmatpush1.msra.mxu0 0.0
        %245 = vmatprep.subr.mxu0 0.0
        %246 = vmatpush1.msra.mxu0 0.0
        %247 = vmatprep.subr.mxu0 0.0
        %248 = vmatpush1.msra.mxu0 0.0
        %249 = vmatprep.subr.mxu0 0.0
        %250 = vmatpush1.msra.mxu0 0.0
        %251 = vmatprep.subr.mxu0 0.0
        %252 = vmatpush1.msra.mxu0 0.0
        %253 = vmatprep.subr.mxu0 0.0
        %254 = vmatpush1.msra.mxu0 0.0
        %255 = vmatprep.subr.mxu0 0.0
        %256 = vmatpush1.msra.mxu0 0.0
        %257 = vmatprep.subr.mxu0 0.0
        %258 = vmatpush1.msra.mxu0 0.0
        %259 = vmatprep.subr.mxu0 0.0
        %260 = vmatpush1.msra.mxu0 0.0
        %261 = vmatprep.subr.mxu0 0.0
        %262 = vmatpush1.msra.mxu0 0.0
        %263 = vmatprep.subr.mxu0 0.0
        %264 = vmatpush1.msra.mxu0 0.0
        %265 = vmatprep.subr.mxu0 0.0
        %266 = vmatpush1.msra.mxu0 0.0
        %267 = vmatprep.subr.mxu0 0.0
        %268 = vmatpush1.msra.mxu0 0.0
        %269 = vmatprep.subr.mxu0 0.0
        %270 = vmatpush1.msra.mxu0 0.0
        %271 = vmatprep.subr.mxu0 0.0
        %272 = vmatpush1.msra.mxu0 0.0
        %273 = vmatprep.subr.mxu0 0.0
        %274 = vmatpush1.msra.mxu0 0.0
        %275 = vmatprep.subr.mxu0 0.0
        %276 = vmatpush1.msra.mxu0 0.0
        %277 = vmatprep.subr.mxu0 0.0
        %278 = vmatpush1.msra.mxu0 0.0
        %279 = vmatprep.subr.mxu0 0.0
        %280 = vmatpush1.msra.mxu0 0.0
        %281 = vmatprep.mubr.f32.mxu0 0.0
        %282 = vmatmul.mubr.f32.gmra.mrb[0].mxu0 %v215
        %v283 = vpop.f32.mrb[0].mxu0
        %v284 = vadd.f32 %v211, %v283
        %v285 = vpop.f32.mrb[0].mxu0
        %286 = vdwg.mxu0
        %288 = vrot.lane.b32.xlu0 %v284, 120
        %v289 = vpop.permute.xlu0 %288
        %290 = vrot.lane.b32.xlu0 %v284, 112
        %v291 = vpop.permute.xlu0 %290
        %292 = vrot.lane.b32.xlu0 %v284, 104
        %v293 = vpop.permute.xlu0 %292
        %294 = vrot.lane.b32.xlu0 %v284, 96
        %v295 = vpop.permute.xlu0 %294
        %vm296 = vcmask 64512
        %v297 = vsel %vm296, %v284, 0
        %v299 = vsel %vm296, %v295, 0
        %301 = vmatprep.subr.mxu0 0.0
        %302 = vmatpush1.xpose.msra.mxu0 %v299
        %303 = vmatprep.subr.mxu0 0.0
        %304 = vmatpush1.xpose.msra.mxu0 0.0
        %305 = vmatprep.subr.mxu0 0.0
        %306 = vmatpush1.xpose.msra.mxu0 0.0
        %307 = vmatprep.subr.mxu0 0.0
        %308 = vmatpush1.xpose.msra.mxu0 0.0
        %309 = vmatprep.subr.mxu0 0.0
        %310 = vmatpush1.xpose.msra.mxu0 0.0
        %311 = vmatprep.subr.mxu0 0.0
        %312 = vmatpush1.xpose.msra.mxu0 0.0
        %313 = vmatprep.subr.mxu0 0.0
        %314 = vmatpush1.xpose.msra.mxu0 0.0
        %315 = vmatprep.subr.mxu0 0.0
        %316 = vmatpush1.xpose.msra.mxu0 0.0
        %317 = vmatprep.subr.mxu0 0.0
        %318 = vmatpush1.xpose.msra.mxu0 0.0
        %319 = vmatprep.subr.mxu0 0.0
        %320 = vmatpush1.xpose.msra.mxu0 0.0
        %321 = vmatprep.subr.mxu0 0.0
        %322 = vmatpush1.xpose.msra.mxu0 0.0
        %323 = vmatprep.subr.mxu0 0.0
        %324 = vmatpush1.xpose.msra.mxu0 0.0
        %325 = vmatprep.subr.mxu0 0.0
        %326 = vmatpush1.xpose.msra.mxu0 0.0
        %327 = vmatprep.subr.mxu0 0.0
        %328 = vmatpush1.xpose.msra.mxu0 0.0
        %329 = vmatprep.subr.mxu0 0.0
        %330 = vmatpush1.xpose.msra.mxu0 0.0
        %331 = vmatprep.subr.mxu0 0.0
        %332 = vmatpush1.xpose.msra.mxu0 0.0
        %333 = vmatprep.subr.mxu0 0.0
        %334 = vmatpush1.xpose.msra.mxu0 0.0
        %335 = vmatprep.subr.mxu0 0.0
        %336 = vmatpush1.xpose.msra.mxu0 0.0
        %337 = vmatprep.subr.mxu0 0.0
        %338 = vmatpush1.xpose.msra.mxu0 0.0
        %339 = vmatprep.subr.mxu0 0.0
        %340 = vmatpush1.xpose.msra.mxu0 0.0
        %341 = vmatprep.subr.mxu0 0.0
        %342 = vmatpush1.xpose.msra.mxu0 0.0
        %343 = vmatprep.subr.mxu0 0.0
        %344 = vmatpush1.xpose.msra.mxu0 0.0
        %345 = vmatprep.subr.mxu0 0.0
        %346 = vmatpush1.xpose.msra.mxu0 0.0
        %347 = vmatprep.subr.mxu0 0.0
        %348 = vmatpush1.xpose.msra.mxu0 0.0
        %349 = vmatprep.subr.mxu0 0.0
        %350 = vmatpush1.xpose.msra.mxu0 0.0
        %351 = vmatprep.subr.mxu0 0.0
        %352 = vmatpush1.xpose.msra.mxu0 0.0
        %353 = vmatprep.subr.mxu0 0.0
        %354 = vmatpush1.xpose.msra.mxu0 0.0
        %355 = vmatprep.subr.mxu0 0.0
        %356 = vmatpush1.xpose.msra.mxu0 0.0
        %357 = vmatprep.subr.mxu0 0.0
        %358 = vmatpush1.xpose.msra.mxu0 0.0
        %359 = vmatprep.subr.mxu0 0.0
        %360 = vmatpush1.xpose.msra.mxu0 0.0
        %361 = vmatprep.subr.mxu0 0.0
        %362 = vmatpush1.xpose.msra.mxu0 0.0
        %363 = vmatprep.subr.mxu0 0.0
        %364 = vmatpush1.xpose.msra.mxu0 0.0
        %365 = vmatprep.mubr.f32.mxu0 0.0
        %366 = vmatmul.mubr.f32.gmra.mrb[0].mxu0 %v297
        %v367 = vpop.f32.mrb[0].mxu0
        %v368 = vadd.f32 0.0, %v367
        %v369 = vpop.f32.mrb[0].mxu0
        %370 = vdwg.mxu0
        %371 = vrot.lane.b32.xlu0 %v289, 96
        %v372 = vpop.permute.xlu0 %371
        %v373 = vsel %vm296, %v289, 0
        %v375 = vsel %vm296, %v372, 0
        %377 = vmatprep.subr.mxu0 0.0
        %378 = vmatpush1.xpose.msra.mxu0 %v375
        %379 = vmatprep.subr.mxu0 0.0
        %380 = vmatpush1.xpose.msra.mxu0 0.0
        %381 = vmatprep.subr.mxu0 0.0
        %382 = vmatpush1.xpose.msra.mxu0 0.0
        %383 = vmatprep.subr.mxu0 0.0
        %384 = vmatpush1.xpose.msra.mxu0 0.0
        %385 = vmatprep.subr.mxu0 0.0
        %386 = vmatpush1.xpose.msra.mxu0 0.0
        %387 = vmatprep.subr.mxu0 0.0
        %388 = vmatpush1.xpose.msra.mxu0 0.0
        %389 = vmatprep.subr.mxu0 0.0
        %390 = vmatpush1.xpose.msra.mxu0 0.0
        %391 = vmatprep.subr.mxu0 0.0
        %392 = vmatpush1.xpose.msra.mxu0 0.0
        %393 = vmatprep.subr.mxu0 0.0
        %394 = vmatpush1.xpose.msra.mxu0 0.0
        %395 = vmatprep.subr.mxu0 0.0
        %396 = vmatpush1.xpose.msra.mxu0 0.0
        %397 = vmatprep.subr.mxu0 0.0
        %398 = vmatpush1.xpose.msra.mxu0 0.0
        %399 = vmatprep.subr.mxu0 0.0
        %400 = vmatpush1.xpose.msra.mxu0 0.0
        %401 = vmatprep.subr.mxu0 0.0
        %402 = vmatpush1.xpose.msra.mxu0 0.0
        %403 = vmatprep.subr.mxu0 0.0
        %404 = vmatpush1.xpose.msra.mxu0 0.0
        %405 = vmatprep.subr.mxu0 0.0
        %406 = vmatpush1.xpose.msra.mxu0 0.0
        %407 = vmatprep.subr.mxu0 0.0
        %408 = vmatpush1.xpose.msra.mxu0 0.0
        %409 = vmatprep.subr.mxu0 0.0
        %410 = vmatpush1.xpose.msra.mxu0 0.0
        %411 = vmatprep.subr.mxu0 0.0
        %412 = vmatpush1.xpose.msra.mxu0 0.0
        %413 = vmatprep.subr.mxu0 0.0
        %414 = vmatpush1.xpose.msra.mxu0 0.0
        %415 = vmatprep.subr.mxu0 0.0
        %416 = vmatpush1.xpose.msra.mxu0 0.0
        %417 = vmatprep.subr.mxu0 0.0
        %418 = vmatpush1.xpose.msra.mxu0 0.0
        %419 = vmatprep.subr.mxu0 0.0
        %420 = vmatpush1.xpose.msra.mxu0 0.0
        %421 = vmatprep.subr.mxu0 0.0
        %422 = vmatpush1.xpose.msra.mxu0 0.0
        %423 = vmatprep.subr.mxu0 0.0
        %424 = vmatpush1.xpose.msra.mxu0 0.0
        %425 = vmatprep.subr.mxu0 0.0
        %426 = vmatpush1.xpose.msra.mxu0 0.0
        %427 = vmatprep.subr.mxu0 0.0
        %428 = vmatpush1.xpose.msra.mxu0 0.0
        %429 = vmatprep.subr.mxu0 0.0
        %430 = vmatpush1.xpose.msra.mxu0 0.0
        %431 = vmatprep.subr.mxu0 0.0
        %432 = vmatpush1.xpose.msra.mxu0 0.0
        %433 = vmatprep.subr.mxu0 0.0
        %434 = vmatpush1.xpose.msra.mxu0 0.0
        %435 = vmatprep.subr.mxu0 0.0
        %436 = vmatpush1.xpose.msra.mxu0 0.0
        %437 = vmatprep.subr.mxu0 0.0
        %438 = vmatpush1.xpose.msra.mxu0 0.0
        %439 = vmatprep.subr.mxu0 0.0
        %440 = vmatpush1.xpose.msra.mxu0 0.0
        %441 = vmatprep.mubr.f32.mxu0 0.0
        %442 = vmatmul.mubr.f32.gmra.mrb[0].mxu0 %v373
        %v443 = vpop.f32.mrb[0].mxu0
        %v444 = vadd.f32 0.0, %v443
        %v445 = vpop.f32.mrb[0].mxu0
        %446 = vdwg.mxu0
        %447 = vrot.lane.b32.xlu0 %v291, 96
        %v448 = vpop.permute.xlu0 %447
        %v449 = vsel %vm296, %v291, 0
        %v451 = vsel %vm296, %v448, 0
        %453 = vmatprep.subr.mxu0 0.0
        %454 = vmatpush1.xpose.msra.mxu0 %v451
        %455 = vmatprep.subr.mxu0 0.0
        %456 = vmatpush1.xpose.msra.mxu0 0.0
        %457 = vmatprep.subr.mxu0 0.0
        %458 = vmatpush1.xpose.msra.mxu0 0.0
        %459 = vmatprep.subr.mxu0 0.0
        %460 = vmatpush1.xpose.msra.mxu0 0.0
        %461 = vmatprep.subr.mxu0 0.0
        %462 = vmatpush1.xpose.msra.mxu0 0.0
        %463 = vmatprep.subr.mxu0 0.0
        %464 = vmatpush1.xpose.msra.mxu0 0.0
        %465 = vmatprep.subr.mxu0 0.0
        %466 = vmatpush1.xpose.msra.mxu0 0.0
        %467 = vmatprep.subr.mxu0 0.0
        %468 = vmatpush1.xpose.msra.mxu0 0.0
        %469 = vmatprep.subr.mxu0 0.0
        %470 = vmatpush1.xpose.msra.mxu0 0.0
        %471 = vmatprep.subr.mxu0 0.0
        %472 = vmatpush1.xpose.msra.mxu0 0.0
        %473 = vmatprep.subr.mxu0 0.0
        %474 = vmatpush1.xpose.msra.mxu0 0.0
        %475 = vmatprep.subr.mxu0 0.0
        %476 = vmatpush1.xpose.msra.mxu0 0.0
        %477 = vmatprep.subr.mxu0 0.0
        %478 = vmatpush1.xpose.msra.mxu0 0.0
        %479 = vmatprep.subr.mxu0 0.0
        %480 = vmatpush1.xpose.msra.mxu0 0.0
        %481 = vmatprep.subr.mxu0 0.0
        %482 = vmatpush1.xpose.msra.mxu0 0.0
        %483 = vmatprep.subr.mxu0 0.0
        %484 = vmatpush1.xpose.msra.mxu0 0.0
        %485 = vmatprep.subr.mxu0 0.0
        %486 = vmatpush1.xpose.msra.mxu0 0.0
        %487 = vmatprep.subr.mxu0 0.0
        %488 = vmatpush1.xpose.msra.mxu0 0.0
        %489 = vmatprep.subr.mxu0 0.0
        %490 = vmatpush1.xpose.msra.mxu0 0.0
        %491 = vmatprep.subr.mxu0 0.0
        %492 = vmatpush1.xpose.msra.mxu0 0.0
        %493 = vmatprep.subr.mxu0 0.0
        %494 = vmatpush1.xpose.msra.mxu0 0.0
        %495 = vmatprep.subr.mxu0 0.0
        %496 = vmatpush1.xpose.msra.mxu0 0.0
        %497 = vmatprep.subr.mxu0 0.0
        %498 = vmatpush1.xpose.msra.mxu0 0.0
        %499 = vmatprep.subr.mxu0 0.0
        %500 = vmatpush1.xpose.msra.mxu0 0.0
        %501 = vmatprep.subr.mxu0 0.0
        %502 = vmatpush1.xpose.msra.mxu0 0.0
        %503 = vmatprep.subr.mxu0 0.0
        %504 = vmatpush1.xpose.msra.mxu0 0.0
        %505 = vmatprep.subr.mxu0 0.0
        %506 = vmatpush1.xpose.msra.mxu0 0.0
        %507 = vmatprep.subr.mxu0 0.0
        %508 = vmatpush1.xpose.msra.mxu0 0.0
        %509 = vmatprep.subr.mxu0 0.0
        %510 = vmatpush1.xpose.msra.mxu0 0.0
        %511 = vmatprep.subr.mxu0 0.0
        %512 = vmatpush1.xpose.msra.mxu0 0.0
        %513 = vmatprep.subr.mxu0 0.0
        %514 = vmatpush1.xpose.msra.mxu0 0.0
        %515 = vmatprep.subr.mxu0 0.0
        %516 = vmatpush1.xpose.msra.mxu0 0.0
        %517 = vmatprep.mubr.f32.mxu0 0.0
        %518 = vmatmul.mubr.f32.gmra.mrb[0].mxu0 %v449
        %v519 = vpop.f32.mrb[0].mxu0
        %v520 = vadd.f32 0.0, %v519
        %v521 = vpop.f32.mrb[0].mxu0
        %522 = vdwg.mxu0
        %523 = vrot.lane.b32.xlu0 %v293, 96
        %v524 = vpop.permute.xlu0 %523
        %v525 = vsel %vm296, %v293, 0
        %v527 = vsel %vm296, %v524, 0
        %529 = vmatprep.subr.mxu0 0.0
        %530 = vmatpush1.xpose.msra.mxu0 %v527
        %531 = vmatprep.subr.mxu0 0.0
        %532 = vmatpush1.xpose.msra.mxu0 0.0
        %533 = vmatprep.subr.mxu0 0.0
        %534 = vmatpush1.xpose.msra.mxu0 0.0
        %535 = vmatprep.subr.mxu0 0.0
        %536 = vmatpush1.xpose.msra.mxu0 0.0
        %537 = vmatprep.subr.mxu0 0.0
        %538 = vmatpush1.xpose.msra.mxu0 0.0
        %539 = vmatprep.subr.mxu0 0.0
        %540 = vmatpush1.xpose.msra.mxu0 0.0
        %541 = vmatprep.subr.mxu0 0.0
        %542 = vmatpush1.xpose.msra.mxu0 0.0
        %543 = vmatprep.subr.mxu0 0.0
        %544 = vmatpush1.xpose.msra.mxu0 0.0
        %545 = vmatprep.subr.mxu0 0.0
        %546 = vmatpush1.xpose.msra.mxu0 0.0
        %547 = vmatprep.subr.mxu0 0.0
        %548 = vmatpush1.xpose.msra.mxu0 0.0
        %549 = vmatprep.subr.mxu0 0.0
        %550 = vmatpush1.xpose.msra.mxu0 0.0
        %551 = vmatprep.subr.mxu0 0.0
        %552 = vmatpush1.xpose.msra.mxu0 0.0
        %553 = vmatprep.subr.mxu0 0.0
        %554 = vmatpush1.xpose.msra.mxu0 0.0
        %555 = vmatprep.subr.mxu0 0.0
        %556 = vmatpush1.xpose.msra.mxu0 0.0
        %557 = vmatprep.subr.mxu0 0.0
        %558 = vmatpush1.xpose.msra.mxu0 0.0
        %559 = vmatprep.subr.mxu0 0.0
        %560 = vmatpush1.xpose.msra.mxu0 0.0
        %561 = vmatprep.subr.mxu0 0.0
        %562 = vmatpush1.xpose.msra.mxu0 0.0
        %563 = vmatprep.subr.mxu0 0.0
        %564 = vmatpush1.xpose.msra.mxu0 0.0
        %565 = vmatprep.subr.mxu0 0.0
        %566 = vmatpush1.xpose.msra.mxu0 0.0
        %567 = vmatprep.subr.mxu0 0.0
        %568 = vmatpush1.xpose.msra.mxu0 0.0
        %569 = vmatprep.subr.mxu0 0.0
        %570 = vmatpush1.xpose.msra.mxu0 0.0
        %571 = vmatprep.subr.mxu0 0.0
        %572 = vmatpush1.xpose.msra.mxu0 0.0
        %573 = vmatprep.subr.mxu0 0.0
        %574 = vmatpush1.xpose.msra.mxu0 0.0
        %575 = vmatprep.subr.mxu0 0.0
        %576 = vmatpush1.xpose.msra.mxu0 0.0
        %577 = vmatprep.subr.mxu0 0.0
        %578 = vmatpush1.xpose.msra.mxu0 0.0
        %579 = vmatprep.subr.mxu0 0.0
        %580 = vmatpush1.xpose.msra.mxu0 0.0
        %581 = vmatprep.subr.mxu0 0.0
        %582 = vmatpush1.xpose.msra.mxu0 0.0
        %583 = vmatprep.subr.mxu0 0.0
        %584 = vmatpush1.xpose.msra.mxu0 0.0
        %585 = vmatprep.subr.mxu0 0.0
        %586 = vmatpush1.xpose.msra.mxu0 0.0
        %587 = vmatprep.subr.mxu0 0.0
        %588 = vmatpush1.xpose.msra.mxu0 0.0
        %589 = vmatprep.subr.mxu0 0.0
        %590 = vmatpush1.xpose.msra.mxu0 0.0
        %591 = vmatprep.subr.mxu0 0.0
        %592 = vmatpush1.xpose.msra.mxu0 0.0
        %593 = vmatprep.mubr.f32.mxu0 0.0
        %594 = vmatmul.mubr.f32.gmra.mrb[0].mxu0 %v525
        %v595 = vpop.f32.mrb[0].mxu0
        %v596 = vadd.f32 0.0, %v595
        %v597 = vpop.f32.mrb[0].mxu0
        %598 = vdwg.mxu0
        %v599 = vsel %vm296, %v368, -inf
        %600 = vmax.xlane.f32.xlu0 %v599
        %v601 = vpop.xlane.xlu0 %600
        %v602 = vsel %vm296, %v444, -inf
        %603 = vmax.xlane.f32.xlu0 %v602
        %v604 = vpop.xlane.xlu0 %603
        %v605 = vsel %vm296, %v520, -inf
        %606 = vmax.xlane.f32.xlu0 %v605
        %v607 = vpop.xlane.xlu0 %606
        %v608 = vsel %vm296, %v596, -inf
        %609 = vmax.xlane.f32.xlu0 %v608
        %v610 = vpop.xlane.xlu0 %609
        %v611 = vsub.f32 %v368, %v601
        %v612 = vsub.f32 %v444, %v604
        %v613 = vsub.f32 %v520, %v607
        %v614 = vsub.f32 %v596, %v610
        %v615 = vmul.f32 %v611, 1.442695
        %v616 = vpow.pop %v615
        %v617 = vmul.f32 %v612, 1.442695
        %v618 = vpow.pop %v617
        %v619 = vmul.f32 %v613, 1.442695
        %v620 = vpow.pop %v619
        %v621 = vmul.f32 %v614, 1.442695
        %v622 = vpow.pop %v621
        %v623 = vsel %vm296, %v616, 0.0
        %624 = vadd.xlane.f32.xlu0 %v623
        %v625 = vpop.xlane.xlu0 %624
        %v626 = vsel %vm296, %v618, 0.0
        %627 = vadd.xlane.f32.xlu0 %v626
        %v628 = vpop.xlane.xlu0 %627
        %v629 = vsel %vm296, %v620, 0.0
        %630 = vadd.xlane.f32.xlu0 %v629
        %v631 = vpop.xlane.xlu0 %630
        %v632 = vsel %vm296, %v622, 0.0
        %633 = vadd.xlane.f32.xlu0 %v632
        %v634 = vpop.xlane.xlu0 %633
        %v635 = vrcp.pop %v625
        %v636 = vmul.f32 %v616, %v635
        %v637 = vrcp.pop %v628
        %v638 = vmul.f32 %v618, %v637
        %v639 = vrcp.pop %v631
        %v640 = vmul.f32 %v620, %v639
        %v641 = vrcp.pop %v634
        %v642 = vmul.f32 %v622, %v641
        %643 = vst.msk [vmem:[%s200] sm:$0xff] %vm296, %v636
        %644 = vst.msk [vmem:[%s200 + $0x8] sm:$0xff] %vm296, %v638
        %645 = vst.msk [vmem:[%s200 + $0x10] sm:$0xff] %vm296, %v640
        %646 = vst.msk [vmem:[%s200 + $0x18] sm:$0xff] %vm296, %v642
        %s647 = sand.u32 %s97, 1
        %s648 = scalar_lea.sflag [#allocation4], %s647
        %s649 = sand.u32 %s97, 1
        %s650 = smul.addr %s649, 32
        %s651 = scalar_lea.vmem [#allocation7], %s650
        // Predicated region
        $region41: #{tpu_custom_call.1} parent=31 // pred_check
          %p652 = pneg %p107
        $region42: #{tpu_custom_call.1} parent=31 // pred_check_branch
          %654 = sbr.rel (%p652) target = $region44
        $region43: #{tpu_custom_call.1} parent=31 // pred_region
          %s656 = ssub.s32 512, 512
          %657 = vsyncadd %s648, %s656
          %s658 = smul.addr %s21, 4
          %s659 = smul.addr %s658, 128
          %s660 = scalar_lea.hbm %s3, %s659
          %s661 = sshll.u32 %s651, 4
          %s662 = int_to_ptr.vmem [resolvable:$true] %s661
          %667 = dma.vmem_to_hbm [thread:$0]  %s662, 512, %s660, %s648, 128, 128, 8
        $region44: #{tpu_custom_call.1} parent=31 // pred_fallthru
          _
      $region32: #{tpu_custom_call.1} parent=5 // pred_fallthru
        _
      %p668 = scmp.le.s32.totalorder 2, %s16
      // Predicated region
      $region45: #{tpu_custom_call.1} parent=5 // pred_check
        %p669 = pneg %p668
      $region46: #{tpu_custom_call.1} parent=5 // pred_check_branch
        %671 = sbr.rel (%p669) target = $region48
      $region47: #{tpu_custom_call.1} parent=5 // pred_region
        %s672 = ssub.s32 %s16, 2
        // Predicated region
        $region49: #{tpu_custom_call.1} parent=47 // pred_check
          %p673 = pneg %p113
        $region50: #{tpu_custom_call.1} parent=47 // pred_check_branch
          %675 = sbr.rel (%p673) target = $region52
        $region51: #{tpu_custom_call.1} parent=47 // pred_region
          %s676 = sand.u32 %s98, 1
          %s677 = scalar_lea.sflag [#allocation4], %s676
          %s678 = sand.u32 %s98, 1
          %s679 = smul.addr %s678, 32
          %s680 = scalar_lea.vmem [#allocation7], %s679
          %681 = dma.done %s677, 512
        $region52: #{tpu_custom_call.1} parent=47 // pred_fallthru
          _
      $region48: #{tpu_custom_call.1} parent=5 // pred_fallthru
        _
    $region6: #{tpu_custom_call.1} parent=1 // loop_footer
      %s20 = sadd.s32 1, %s16
    $region7: #{tpu_custom_call.1} parent=1 // loop_footer_branch
      %15 = sbr.rel target = $region3
    $region8: #{tpu_custom_call.1} parent=1 // loop_exit
      _
    %682 = vsyncpa [#allocation3], 1
    %s683 = scalar_lea.sflag [#allocation3], 1
    %684 = vsyncpa %s683, 1
    %685 = vsyncpa [#allocation6], 1
    %686 = vsyncpa [#allocation4], 1
    %s687 = scalar_lea.sflag [#allocation4], 1
    %688 = vsyncpa %s687, 1

</llo_original>
